<compile_context>
chip_gen: v7x
topology: tpu7x:2x2x1
jax: 0.10.0
libtpu: 0.0.40
codegen_flags: <defaults>
</compile_context>

<pallas_src>
import numpy as np
import jax
import jax.numpy as jnp
from jax.experimental import pallas as pl
from jax.experimental.pallas import tpu as pltpu


def addvar_pool_kernel(batch_ref, x_ref, w_ref, b_ref, out_ref, acc_ref):
    step = pl.program_id(0)

    @pl.when(step == 0)
    def _():
        acc_ref[...] = jnp.zeros_like(acc_ref)

    x = x_ref[...]                                   # [tile_N, Din] f32
    w = w_ref[...]                                   # [Din, M]      f32
    b = b_ref[...]                                   # [1, M]        f32

    # Linear projection (MXU).
    feats = jnp.dot(x, w, preferred_element_type=jnp.float32) + b    # [tile_N, M]

    # One-hot membership built pre-transposed: one_hot_t[g, n] = (batch[n] == g).
    batch = batch_ref[...]                           # [1, tile_N] int32
    n_graphs = acc_ref.shape[0]
    tile_n = batch.shape[1]
    graph_ids = jax.lax.broadcasted_iota(jnp.int32, (n_graphs, tile_n), 0)
    one_hot_t = (batch == graph_ids).astype(jnp.float32)              # [G, tile_N]

    # Fused scatter of [feats | feats^2 | 1] in ONE MXU pass:
    # columns 0..M-1 -> sum, M..2M-1 -> sum of squares, 2M -> node counts.
    ones_col = jnp.ones((tile_n, 1), jnp.float32)
    fused = jnp.concatenate([feats, feats * feats, ones_col], axis=-1)  # [tile_N, 2M+1]
    acc_ref[...] += jnp.dot(one_hot_t, fused,
                            preferred_element_type=jnp.float32)        # [G, 2M+1]

    @pl.when(step == pl.num_programs(0) - 1)
    def _():
        m = w_ref.shape[1]
        acc = acc_ref[...]
        sums = acc[:, :m]
        sumsq = acc[:, m:2 * m]
        counts = acc[:, 2 * m:2 * m + 1]
        # torch_scatter.scatter_std (unbiased=True):
        #   count_c = clamp(count, 1); mean = sum / count_c
        #   ssd     = sum((x - mean)^2) == sumsq - sum * mean
        #   std     = sqrt(ssd / (clamp(count_c - 1, 1) + 1e-6))
        cnt_clamped = jnp.maximum(counts, 1.0)
        mean = sums / cnt_clamped
        ssd = jnp.maximum(sumsq - sums * mean, 0.0)
        denom = jnp.maximum(counts - 1.0, 1.0) + 1e-6
        std = jnp.sqrt(ssd / denom)
        # Single lane-dense store (add_features first, then std -> matches torch.cat order).
        out_ref[...] = jnp.concatenate([sums, std], axis=-1).astype(out_ref.dtype)


def global_add_var_pool(x, batch, w, b, num_graphs, tile_n=512):
    """x: [N, Din] f32, batch: [N] int32 graph ids, w: [Din, M] f32, b: [M] f32."""
    n, din = x.shape
    m = w.shape[1]

    # Node tile: multiple of 128, no larger than the 128-padded node count.
    tile_n = int(min(tile_n, pl.cdiv(n, 128) * 128))
    tile_n = max(128, (tile_n // 128) * 128)

    # Pad node dimension up to a multiple of tile_n; padded rows get batch=-1
    # so their one-hot column is all-zero and they contribute nothing.
    n_pad = pl.cdiv(n, tile_n) * tile_n
    pad = n_pad - n
    x_p = jnp.pad(x, ((0, pad), (0, 0)))
    batch_p = jnp.pad(batch.astype(jnp.int32), (0, pad), constant_values=-1)
    batch2d = batch_p.reshape(1, n_pad)
    b2d = b.reshape(1, m)

    grid = (n_pad // tile_n,)
    acc_w = 2 * m + 1

    cost = pl.CostEstimate(
        flops=2 * n_pad * din * m + 2 * n_pad * num_graphs * acc_w,
        transcendentals=num_graphs * m,
        bytes_accessed=4 * (n_pad * din + n_pad + din * m + m + num_graphs * 2 * m),
    )

    return pl.pallas_call(
        addvar_pool_kernel,
        out_shape=jax.ShapeDtypeStruct((num_graphs, 2 * m), jnp.float32),
        grid_spec=pltpu.PrefetchScalarGridSpec(
            num_scalar_prefetch=0,
            grid=grid,
            in_specs=[
                pl.BlockSpec((1, tile_n), lambda i: (0, i)),     # batch ids (pre-transposed row)
                pl.BlockSpec((tile_n, din), lambda i: (i, 0)),   # x tile
                pl.BlockSpec((din, m), lambda i: (0, 0)),        # weight (resident)
                pl.BlockSpec((1, m), lambda i: (0, 0)),          # bias   (resident)
            ],
            out_specs=pl.BlockSpec((num_graphs, 2 * m), lambda i: (0, 0)),
            scratch_shapes=[
                pltpu.VMEM((num_graphs, acc_w), jnp.float32),    # fused sum | sumsq | count acc
            ],
        ),
        compiler_params=pltpu.CompilerParams(
            dimension_semantics=("arbitrary",),
            vmem_limit_bytes=64 * 1024 * 1024,
        ),
        cost_estimate=cost,
    )(batch2d, x_p, w, b2d)


def reference(x, batch, w, b, num_graphs):
    feats = x @ w + b[None, :]
    sums = jax.ops.segment_sum(feats, batch, num_segments=num_graphs)
    sumsq = jax.ops.segment_sum(feats * feats, batch, num_segments=num_graphs)
    counts = jax.ops.segment_sum(jnp.ones((x.shape[0], 1), jnp.float32), batch,
                                 num_segments=num_graphs)
    mean = sums / jnp.maximum(counts, 1.0)
    ssd = jnp.maximum(sumsq - sums * mean, 0.0)
    std = jnp.sqrt(ssd / (jnp.maximum(counts - 1.0, 1.0) + 1e-6))
    return jnp.concatenate([sums, std], axis=-1)


if __name__ == "__main__":
    in_features = 32
    out_features = 16            # must be even; mid_features = 8
    mid_features = out_features // 2
    n_nodes = 300                # -> padded to 384 (single 384-row tile)
    num_graphs = 5

    key = jax.random.PRNGKey(0)
    kx, kw, kb = jax.random.split(key, 3)

    x = jax.random.normal(kx, (n_nodes, in_features), dtype=jnp.float32)
    # 5 graphs with 60 nodes each (sorted batch vector, as in PyG batching).
    batch = jnp.repeat(jnp.arange(num_graphs, dtype=jnp.int32),
                       n_nodes // num_graphs)

    # Deterministic Linear params (torch stores weight [M, Din]; we keep [Din, M]).
    bound = 1.0 / np.sqrt(in_features)
    w = jax.random.uniform(kw, (in_features, mid_features), jnp.float32, -bound, bound)
    b = jax.random.uniform(kb, (mid_features,), jnp.float32, -bound, bound)

    out = global_add_var_pool(x, batch, w, b, num_graphs)
    out = jax.block_until_ready(out)

    ref = reference(x, batch, w, b, num_graphs)
    assert out.shape == (num_graphs, out_features)
    np.testing.assert_allclose(np.asarray(out), np.asarray(ref), rtol=1e-4, atol=1e-4)

    # Exercise the multi-step (grid > 1) accumulation path as well.
    out2 = jax.block_until_ready(
        global_add_var_pool(x, batch, w, b, num_graphs, tile_n=128))
    np.testing.assert_allclose(np.asarray(out2), np.asarray(ref), rtol=1e-4, atol=1e-4)

    print("KERNEL_OK")
</pallas_src>

<mosaic_0001>
module attributes {stable_mosaic.version = 11 : i64} {
  func.func @addvar_pool_kernel(%arg0: i32, %arg1: memref<1x384xi32, #tpu.memory_space<vmem>>, %arg2: memref<384x32xf32, #tpu.memory_space<vmem>>, %arg3: memref<32x8xf32, #tpu.memory_space<vmem>>, %arg4: memref<1x8xf32, #tpu.memory_space<vmem>>, %arg5: memref<5x16xf32, #tpu.memory_space<vmem>>, %arg6: memref<5x17xf32, #tpu.memory_space<vmem>>) attributes {dimension_semantics = [#tpu.dimension_semantics<arbitrary>], iteration_bounds = array<i64: 1>, scalar_prefetch = 0 : i64, scratch_operands = 1 : i64, tpu.core_type = #tpu.core_type<tc>, window_params = [{transform_indices = @transform_0, window_bounds = array<i64: 1, 384>}, {transform_indices = @transform_1, window_bounds = array<i64: 384, 32>}, {pipeline_mode = #tpu.pipeline_mode<synchronous>, transform_indices = @transform_2, window_bounds = array<i64: 32, 8>}, {pipeline_mode = #tpu.pipeline_mode<synchronous>, transform_indices = @transform_3, window_bounds = array<i64: 1, 8>}, {pipeline_mode = #tpu.pipeline_mode<synchronous>, transform_indices = @transform_4, window_bounds = array<i64: 5, 16>}]} {
    %c0_i32 = arith.constant 0 : i32
    %0 = arith.cmpi eq, %arg0, %c0_i32 : i32
    %1 = arith.extui %0 : i1 to i32
    %c0_i32_0 = arith.constant 0 : i32
    %2 = arith.cmpi ne, %1, %c0_i32_0 : i32
    scf.if %2 {
      %cst_16 = arith.constant 0.000000e+00 : f32
      %25 = vector.broadcast %cst_16 : f32 to vector<5x17xf32>
      %c0_17 = arith.constant 0 : index
      %c0_18 = arith.constant 0 : index
      %26 = vector.load %arg6[%c0_17, %c0_18] : memref<5x17xf32, #tpu.memory_space<vmem>>, vector<5x17xf32>
      tpu.vector_store %arg6[%c0_17, %c0_18], %25 {strides = array<i32>} : memref<5x17xf32, #tpu.memory_space<vmem>>, vector<5x17xf32>,
    } else {
    }
    %c0 = arith.constant 0 : index
    %c0_1 = arith.constant 0 : index
    %3 = vector.load %arg2[%c0, %c0_1] : memref<384x32xf32, #tpu.memory_space<vmem>>, vector<384x32xf32>
    %c0_2 = arith.constant 0 : index
    %c0_3 = arith.constant 0 : index
    %4 = vector.load %arg3[%c0_2, %c0_3] : memref<32x8xf32, #tpu.memory_space<vmem>>, vector<32x8xf32>
    %c0_4 = arith.constant 0 : index
    %c0_5 = arith.constant 0 : index
    %5 = vector.load %arg4[%c0_4, %c0_5] : memref<1x8xf32, #tpu.memory_space<vmem>>, vector<1x8xf32>
    %cst = arith.constant dense<0.000000e+00> : vector<384x8xf32>
    %6 = tpu.matmul %3, %4, %cst {dimension_numbers = #tpu.dot_dimension_numbers<[1], [0], [0], [1], [0, 0, 1, 1], [], []>} : vector<384x32xf32>, vector<32x8xf32>, vector<384x8xf32> -> vector<384x8xf32>
    %7 = vector.broadcast %5 : vector<1x8xf32> to vector<384x8xf32>
    %8 = arith.addf %6, %7 : vector<384x8xf32>
    %c0_6 = arith.constant 0 : index
    %c0_7 = arith.constant 0 : index
    %9 = vector.load %arg1[%c0_6, %c0_7] : memref<1x384xi32, #tpu.memory_space<vmem>>, vector<1x384xi32>
    %10 = tpu.iota {dimensions = array<i32: 0>} : vector<5x384xi32>
    %11 = vector.broadcast %9 : vector<1x384xi32> to vector<5x384xi32>
    %12 = arith.cmpi eq, %11, %10 : vector<5x384xi32>
    %13 = arith.extui %12 : vector<5x384xi1> to vector<5x384xi32>
    %14 = arith.sitofp %13 : vector<5x384xi32> to vector<5x384xf32>
    %cst_8 = arith.constant 1.000000e+00 : f32
    %15 = vector.broadcast %cst_8 : f32 to vector<384x1xf32>
    %16 = arith.mulf %8, %8 : vector<384x8xf32>
    %17 = tpu.concatenate %8, %16, %15 in 1 : vector<384x8xf32>, vector<384x8xf32>, vector<384x1xf32> -> vector<384x17xf32>
    %c0_9 = arith.constant 0 : index
    %c0_10 = arith.constant 0 : index
    %18 = vector.load %arg6[%c0_9, %c0_10] : memref<5x17xf32, #tpu.memory_space<vmem>>, vector<5x17xf32>
    %cst_11 = arith.constant dense<0.000000e+00> : vector<5x17xf32>
    %19 = tpu.matmul %14, %17, %cst_11 {dimension_numbers = #tpu.dot_dimension_numbers<[1], [0], [0], [1], [0, 0, 1, 1], [], []>} : vector<5x384xf32>, vector<384x17xf32>, vector<5x17xf32> -> vector<5x17xf32>
    %20 = arith.addf %18, %19 : vector<5x17xf32>
    %c0_12 = arith.constant 0 : index
    %c0_13 = arith.constant 0 : index
    %21 = vector.load %arg6[%c0_12, %c0_13] : memref<5x17xf32, #tpu.memory_space<vmem>>, vector<5x17xf32>
    tpu.vector_store %arg6[%c0_12, %c0_13], %20 {strides = array<i32>} : memref<5x17xf32, #tpu.memory_space<vmem>>, vector<5x17xf32>,
    %c0_i32_14 = arith.constant 0 : i32
    %22 = arith.cmpi eq, %arg0, %c0_i32_14 : i32
    %23 = arith.extui %22 : i1 to i32
    %c0_i32_15 = arith.constant 0 : i32
    %24 = arith.cmpi ne, %23, %c0_i32_15 : i32
    scf.if %24 {
      %c0_16 = arith.constant 0 : index
      %c0_17 = arith.constant 0 : index
      %25 = vector.load %arg6[%c0_16, %c0_17] : memref<5x17xf32, #tpu.memory_space<vmem>>, vector<5x17xf32>
      %26 = vector.extract_strided_slice %25 {offsets = [0, 0], sizes = [5, 8], strides = [1, 1]} : vector<5x17xf32> to vector<5x8xf32>
      %27 = vector.extract_strided_slice %25 {offsets = [0, 8], sizes = [5, 8], strides = [1, 1]} : vector<5x17xf32> to vector<5x8xf32>
      %28 = vector.extract_strided_slice %25 {offsets = [0, 16], sizes = [5, 1], strides = [1, 1]} : vector<5x17xf32> to vector<5x1xf32>
      %cst_18 = arith.constant 1.000000e+00 : f32
      %29 = vector.broadcast %cst_18 : f32 to vector<5x1xf32>
      %30 = arith.maximumf %28, %29 : vector<5x1xf32>
      %31 = vector.broadcast %30 : vector<5x1xf32> to vector<5x8xf32>
      %32 = arith.divf %26, %31 : vector<5x8xf32>
      %33 = arith.mulf %26, %32 : vector<5x8xf32>
      %34 = arith.subf %27, %33 : vector<5x8xf32>
      %cst_19 = arith.constant 0.000000e+00 : f32
      %35 = vector.broadcast %cst_19 : f32 to vector<5x8xf32>
      %36 = arith.maximumf %34, %35 : vector<5x8xf32>
      %cst_20 = arith.constant 1.000000e+00 : f32
      %37 = vector.broadcast %cst_20 : f32 to vector<5x1xf32>
      %38 = arith.subf %28, %37 : vector<5x1xf32>
      %cst_21 = arith.constant 1.000000e+00 : f32
      %39 = vector.broadcast %cst_21 : f32 to vector<5x1xf32>
      %40 = arith.maximumf %38, %39 : vector<5x1xf32>
      %cst_22 = arith.constant 9.99999997E-7 : f32
      %41 = vector.broadcast %cst_22 : f32 to vector<5x1xf32>
      %42 = arith.addf %40, %41 : vector<5x1xf32>
      %43 = vector.broadcast %42 : vector<5x1xf32> to vector<5x8xf32>
      %44 = arith.divf %36, %43 : vector<5x8xf32>
      %45 = math.sqrt %44 : vector<5x8xf32>
      %46 = tpu.concatenate %26, %45 in 1 : vector<5x8xf32>, vector<5x8xf32> -> vector<5x16xf32>
      %c0_23 = arith.constant 0 : index
      %c0_24 = arith.constant 0 : index
      %47 = vector.load %arg5[%c0_23, %c0_24] : memref<5x16xf32, #tpu.memory_space<vmem>>, vector<5x16xf32>
      tpu.vector_store %arg5[%c0_23, %c0_24], %46 {strides = array<i32>} : memref<5x16xf32, #tpu.memory_space<vmem>>, vector<5x16xf32>,
    } else {
    }
    return
  }
  func.func @transform_0(%arg0: i32) -> (i32, i32) {
    %c0_i32 = arith.constant 0 : i32
    %c0_i32_0 = arith.constant 0 : i32
    return %c0_i32, %arg0 : i32, i32
  }
  func.func @transform_1(%arg0: i32) -> (i32, i32) {
    %c0_i32 = arith.constant 0 : i32
    %c0_i32_0 = arith.constant 0 : i32
    return %arg0, %c0_i32 : i32, i32
  }
  func.func @transform_2(%arg0: i32) -> (i32, i32) {
    %c0_i32 = arith.constant 0 : i32
    %c0_i32_0 = arith.constant 0 : i32
    %c0_i32_1 = arith.constant 0 : i32
    return %c0_i32, %c0_i32_0 : i32, i32
  }
  func.func @transform_3(%arg0: i32) -> (i32, i32) {
    %c0_i32 = arith.constant 0 : i32
    %c0_i32_0 = arith.constant 0 : i32
    %c0_i32_1 = arith.constant 0 : i32
    return %c0_i32, %c0_i32_0 : i32, i32
  }
  func.func @transform_4(%arg0: i32) -> (i32, i32) {
    %c0_i32 = arith.constant 0 : i32
    %c0_i32_0 = arith.constant 0 : i32
    %c0_i32_1 = arith.constant 0 : i32
    return %c0_i32, %c0_i32_0 : i32, i32
  }
}

</mosaic_0001>

<llo_original>
// kernel: tpu_custom_call.1
$region0: #{tpu_custom_call.1}
  #allocation0 [shape = 'u32[]', space=smem, size = 0x4, offset = 0x4, fixed_abs, tag = 'smem constant byte address 0x4 - core index']
  #allocation1 [shape = 'u32[144,128]{1,0:T(1,128)}', space=vmem, size = 0x12000, scoped, tag = 'internal scratch']
  #allocation2 [shape = 'f32[5,17]{1,0:T(8,128)}', space=vmem, size = 0x1000, scoped, tag = 'scratch operand']
  %s0 = inlined_call_operand.hbm [shape: s32[1,384], index: 0, kind: input, shape index: {}]
  %s1 = inlined_call_operand.hbm [shape: f32[384,32], index: 1, kind: input, shape index: {}]
  %s2 = inlined_call_operand.hbm [shape: f32[32,8], index: 2, kind: input, shape index: {}]
  %s3 = inlined_call_operand.hbm [shape: f32[1,8], index: 3, kind: input, shape index: {}]
  %s4 = inlined_call_operand.hbm [shape: f32[5,16], index: 4, kind: output, shape index: {}]
  %s5 = sld [smem:[#allocation0]]
  $region50: #{tpu_custom_call.1} parent=0
    _
  %s7 = ssub.s32 1, %s5
  %s8 = scalar_select 0, %s7, %s5
  $region1: #{tpu_custom_call.1} parent=0
    #allocation3 [shape = 'u8[1536]{0}', space=vmem, size = 0x800, scoped, tag = 'input window, operand 0, single buffered']
    #allocation4 [shape = 's32[1]{0}', space=sflag, size = 0x4, scoped, tag = 'scoped memory for tpu_custom_call.1']
    #allocation5 [shape = 's32[1]{0}', space=sflag, size = 0x4, scoped, tag = 'scoped memory for tpu_custom_call.1']
    #allocation6 [shape = 'u8[196608]{0}', space=vmem, size = 0x30000, scoped, tag = 'input window, operand 1, single buffered']
    #allocation7 [shape = 's32[1]{0}', space=sflag, size = 0x4, scoped, tag = 'scoped memory for tpu_custom_call.1']
    #allocation8 [shape = 'u8[16384]{0}', space=vmem, size = 0x4000, scoped, tag = 'input window, operand 2, single buffered']
    #allocation9 [shape = 'u8[512]{0}', space=vmem, size = 0x400, scoped, tag = 'input window, operand 3, single buffered']
    #allocation10 [shape = 's32[1]{0}', space=sflag, size = 0x4, scoped, tag = 'scoped memory for tpu_custom_call.1']
    #allocation11 [shape = 'u8[4096]{0}', space=vmem, size = 0x1000, scoped, tag = 'output window, operand 0, single buffered']
    %9 = vsyncpa [#allocation4], 0
    %10 = vsyncpa [#allocation7], 0
    %11 = vsyncpa [#allocation10], 0
    %12 = vsyncpa [#allocation5], 0
    // Predicated region
    $region2: #{tpu_custom_call.1} parent=1 // pred_check
      _
    $region3: #{tpu_custom_call.1} parent=1 // pred_check_branch
      %14 = sbr.rel (0) target = $region5
    $region4: #{tpu_custom_call.1} parent=1 // pred_region
      %s16 = ssub.s32 48, 48
      %17 = vsyncadd [#allocation4], %s16
      %s19 = sshll.u32 [#allocation3], 4
      %s20 = int_to_ptr.vmem [resolvable:$true] %s19
      %22 = dma.hbm_to_vmem [thread:$0]  %s0, 48, %s20, [#allocation4]
    $region5: #{tpu_custom_call.1} parent=1 // pred_fallthru
      _
    // Predicated region
    $region6: #{tpu_custom_call.1} parent=1 // pred_check
      _
    $region7: #{tpu_custom_call.1} parent=1 // pred_check_branch
      %24 = sbr.rel (0) target = $region9
    $region8: #{tpu_custom_call.1} parent=1 // pred_region
      %s26 = ssub.s32 6144, 6144
      %27 = vsyncadd [#allocation7], %s26
      %s28 = sshll.u32 [#allocation6], 4
      %s29 = int_to_ptr.vmem [resolvable:$true] %s28
      %34 = dma.hbm_to_vmem [thread:$0]  %s1, 6144, %s29, [#allocation7], 128, 128, 8
    $region9: #{tpu_custom_call.1} parent=1 // pred_fallthru
      _
    // Predicated region
    $region10: #{tpu_custom_call.1} parent=1 // pred_check
      _
    $region11: #{tpu_custom_call.1} parent=1 // pred_check_branch
      %36 = sbr.rel (0) target = $region13
    $region12: #{tpu_custom_call.1} parent=1 // pred_region
      %s38 = ssub.s32 512, 512
      %39 = vsyncadd [#allocation7], %s38
      %s40 = sshll.u32 [#allocation8], 4
      %s41 = int_to_ptr.vmem [resolvable:$true] %s40
      %46 = dma.hbm_to_vmem [thread:$0]  %s2, 512, %s41, [#allocation7], 128, 128, 8
    $region13: #{tpu_custom_call.1} parent=1 // pred_fallthru
      _
    // Predicated region
    $region14: #{tpu_custom_call.1} parent=1 // pred_check
      _
    $region15: #{tpu_custom_call.1} parent=1 // pred_check_branch
      %48 = sbr.rel (0) target = $region17
    $region16: #{tpu_custom_call.1} parent=1 // pred_region
      %s50 = ssub.s32 16, 16
      %51 = vsyncadd [#allocation10], %s50
      %s53 = sshll.u32 [#allocation9], 4
      %s54 = int_to_ptr.vmem [resolvable:$true] %s53
      %56 = dma.hbm_to_vmem [thread:$0]  %s3, 16, %s54, [#allocation10]
    $region17: #{tpu_custom_call.1} parent=1 // pred_fallthru
      _
    // Predicated region
    $region18: #{tpu_custom_call.1} parent=1 // pred_check
      _
    $region19: #{tpu_custom_call.1} parent=1 // pred_check_branch
      %58 = sbr.rel (0) target = $region21
    $region20: #{tpu_custom_call.1} parent=1 // pred_region
      %59 = dma.done [#allocation4], 48
    $region21: #{tpu_custom_call.1} parent=1 // pred_fallthru
      _
    // Predicated region
    $region22: #{tpu_custom_call.1} parent=1 // pred_check
      _
    $region23: #{tpu_custom_call.1} parent=1 // pred_check_branch
      %61 = sbr.rel (0) target = $region25
    $region24: #{tpu_custom_call.1} parent=1 // pred_region
      %62 = dma.done [#allocation7], 6144
    $region25: #{tpu_custom_call.1} parent=1 // pred_fallthru
      _
    // Predicated region
    $region26: #{tpu_custom_call.1} parent=1 // pred_check
      _
    $region27: #{tpu_custom_call.1} parent=1 // pred_check_branch
      %64 = sbr.rel (0) target = $region29
    $region28: #{tpu_custom_call.1} parent=1 // pred_region
      %65 = dma.done [#allocation7], 512
    $region29: #{tpu_custom_call.1} parent=1 // pred_fallthru
      _
    // Predicated region
    $region30: #{tpu_custom_call.1} parent=1 // pred_check
      _
    $region31: #{tpu_custom_call.1} parent=1 // pred_check_branch
      %67 = sbr.rel (0) target = $region33
    $region32: #{tpu_custom_call.1} parent=1 // pred_region
      %68 = dma.done [#allocation10], 16
    $region33: #{tpu_custom_call.1} parent=1 // pred_fallthru
      _
    %p69 = scmp.eq.s32.totalorder 0, 0
    // Predicated region
    $region34: #{tpu_custom_call.1} parent=1 // pred_check
      %p70 = pneg %p69
    $region35: #{tpu_custom_call.1} parent=1 // pred_check_branch
      %72 = sbr.rel (%p70) target = $region37
    $region36: #{tpu_custom_call.1} parent=1 // pred_region
      %vm73 = vcmask 135168
      %74 = vst.msk [vmem:[#allocation2] sm:$0x1f] %vm73, 0.0
    $region37: #{tpu_custom_call.1} parent=1 // pred_fallthru
      _
    %v75 = vld [vmem:[#allocation6] sm:$0xff]
    %v76 = vld [vmem:[#allocation6 + $0x8] sm:$0xff]
    %v77 = vld [vmem:[#allocation6 + $0x10] sm:$0xff]
    %v78 = vld [vmem:[#allocation6 + $0x18] sm:$0xff]
    %v79 = vld [vmem:[#allocation6 + $0x20] sm:$0xff]
    %v80 = vld [vmem:[#allocation6 + $0x28] sm:$0xff]
    %v81 = vld [vmem:[#allocation6 + $0x30] sm:$0xff]
    %v82 = vld [vmem:[#allocation6 + $0x38] sm:$0xff]
    %v83 = vld [vmem:[#allocation6 + $0x40] sm:$0xff]
    %v84 = vld [vmem:[#allocation6 + $0x48] sm:$0xff]
    %v85 = vld [vmem:[#allocation6 + $0x50] sm:$0xff]
    %v86 = vld [vmem:[#allocation6 + $0x58] sm:$0xff]
    %v87 = vld [vmem:[#allocation6 + $0x60] sm:$0xff]
    %v88 = vld [vmem:[#allocation6 + $0x68] sm:$0xff]
    %v89 = vld [vmem:[#allocation6 + $0x70] sm:$0xff]
    %v90 = vld [vmem:[#allocation6 + $0x78] sm:$0xff]
    %v91 = vld [vmem:[#allocation6 + $0x80] sm:$0xff]
    %v92 = vld [vmem:[#allocation6 + $0x88] sm:$0xff]
    %v93 = vld [vmem:[#allocation6 + $0x90] sm:$0xff]
    %v94 = vld [vmem:[#allocation6 + $0x98] sm:$0xff]
    %v95 = vld [vmem:[#allocation6 + $0xa0] sm:$0xff]
    %v96 = vld [vmem:[#allocation6 + $0xa8] sm:$0xff]
    %v97 = vld [vmem:[#allocation6 + $0xb0] sm:$0xff]
    %v98 = vld [vmem:[#allocation6 + $0xb8] sm:$0xff]
    %v99 = vld [vmem:[#allocation6 + $0xc0] sm:$0xff]
    %v100 = vld [vmem:[#allocation6 + $0xc8] sm:$0xff]
    %v101 = vld [vmem:[#allocation6 + $0xd0] sm:$0xff]
    %v102 = vld [vmem:[#allocation6 + $0xd8] sm:$0xff]
    %v103 = vld [vmem:[#allocation6 + $0xe0] sm:$0xff]
    %v104 = vld [vmem:[#allocation6 + $0xe8] sm:$0xff]
    %v105 = vld [vmem:[#allocation6 + $0xf0] sm:$0xff]
    %v106 = vld [vmem:[#allocation6 + $0xf8] sm:$0xff]
    %v107 = vld [vmem:[#allocation6 + $0x100] sm:$0xff]
    %v108 = vld [vmem:[#allocation6 + $0x108] sm:$0xff]
    %v109 = vld [vmem:[#allocation6 + $0x110] sm:$0xff]
    %v110 = vld [vmem:[#allocation6 + $0x118] sm:$0xff]
    %v111 = vld [vmem:[#allocation6 + $0x120] sm:$0xff]
    %v112 = vld [vmem:[#allocation6 + $0x128] sm:$0xff]
    %v113 = vld [vmem:[#allocation6 + $0x130] sm:$0xff]
    %v114 = vld [vmem:[#allocation6 + $0x138] sm:$0xff]
    %v115 = vld [vmem:[#allocation6 + $0x140] sm:$0xff]
    %v116 = vld [vmem:[#allocation6 + $0x148] sm:$0xff]
    %v117 = vld [vmem:[#allocation6 + $0x150] sm:$0xff]
    %v118 = vld [vmem:[#allocation6 + $0x158] sm:$0xff]
    %v119 = vld [vmem:[#allocation6 + $0x160] sm:$0xff]
    %v120 = vld [vmem:[#allocation6 + $0x168] sm:$0xff]
    %v121 = vld [vmem:[#allocation6 + $0x170] sm:$0xff]
    %v122 = vld [vmem:[#allocation6 + $0x178] sm:$0xff]
    %v123 = vld [vmem:[#allocation8] sm:$0xff]
    %v124 = vld [vmem:[#allocation8 + $0x8] sm:$0xff]
    %v125 = vld [vmem:[#allocation8 + $0x10] sm:$0xff]
    %v126 = vld [vmem:[#allocation8 + $0x18] sm:$0xff]
    %v127 = vld [vmem:[#allocation9] sm:$0x1]
    %v129 = vlaneseq
    %v130 = vshrl.u32 %v129, 7
    %v131 = vsub.s32 0, %v130
    %v132 = vrot.slane %v127, %v131
    %vm134 = vcmask 261120
    %v136 = vsel %vm134, %v75, 0
    %v139 = vsel %vm134, %v76, 0
    %v142 = vsel %vm134, %v77, 0
    %v145 = vsel %vm134, %v78, 0
    %v148 = vsel %vm134, %v79, 0
    %v151 = vsel %vm134, %v80, 0
    %v154 = vsel %vm134, %v81, 0
    %v157 = vsel %vm134, %v82, 0
    %v160 = vsel %vm134, %v83, 0
    %v163 = vsel %vm134, %v84, 0
    %v166 = vsel %vm134, %v85, 0
    %v169 = vsel %vm134, %v86, 0
    %v172 = vsel %vm134, %v87, 0
    %v175 = vsel %vm134, %v88, 0
    %v178 = vsel %vm134, %v89, 0
    %v181 = vsel %vm134, %v90, 0
    %v184 = vsel %vm134, %v91, 0
    %v187 = vsel %vm134, %v92, 0
    %v190 = vsel %vm134, %v93, 0
    %v193 = vsel %vm134, %v94, 0
    %v196 = vsel %vm134, %v95, 0
    %v199 = vsel %vm134, %v96, 0
    %v202 = vsel %vm134, %v97, 0
    %v205 = vsel %vm134, %v98, 0
    %v208 = vsel %vm134, %v99, 0
    %v211 = vsel %vm134, %v100, 0
    %v214 = vsel %vm134, %v101, 0
    %v217 = vsel %vm134, %v102, 0
    %v220 = vsel %vm134, %v103, 0
    %v223 = vsel %vm134, %v104, 0
    %v226 = vsel %vm134, %v105, 0
    %v229 = vsel %vm134, %v106, 0
    %v232 = vsel %vm134, %v107, 0
    %v235 = vsel %vm134, %v108, 0
    %v238 = vsel %vm134, %v109, 0
    %v241 = vsel %vm134, %v110, 0
    %v244 = vsel %vm134, %v111, 0
    %v247 = vsel %vm134, %v112, 0
    %v250 = vsel %vm134, %v113, 0
    %v253 = vsel %vm134, %v114, 0
    %v256 = vsel %vm134, %v115, 0
    %v259 = vsel %vm134, %v116, 0
    %v262 = vsel %vm134, %v117, 0
    %v265 = vsel %vm134, %v118, 0
    %v268 = vsel %vm134, %v119, 0
    %v271 = vsel %vm134, %v120, 0
    %v274 = vsel %vm134, %v121, 0
    %v277 = vsel %vm134, %v122, 0
    %279 = vmatprep.subr.mxu0 0.0
    %280 = vmatpush1.msra.mxu0 %v123
    %281 = vmatprep.subr.mxu0 0.0
    %282 = vmatpush1.msra.mxu0 %v124
    %283 = vmatprep.subr.mxu0 0.0
    %284 = vmatpush1.msra.mxu0 %v125
    %285 = vmatprep.subr.mxu0 0.0
    %286 = vmatpush1.msra.mxu0 %v126
    %287 = vmatprep.subr.mxu0 0.0
    %288 = vmatpush1.msra.mxu0 0.0
    %289 = vmatprep.subr.mxu0 0.0
    %290 = vmatpush1.msra.mxu0 0.0
    %291 = vmatprep.subr.mxu0 0.0
    %292 = vmatpush1.msra.mxu0 0.0
    %293 = vmatprep.subr.mxu0 0.0
    %294 = vmatpush1.msra.mxu0 0.0
    %295 = vmatprep.subr.mxu0 0.0
    %296 = vmatpush1.msra.mxu0 0.0
    %297 = vmatprep.subr.mxu0 0.0
    %298 = vmatpush1.msra.mxu0 0.0
    %299 = vmatprep.subr.mxu0 0.0
    %300 = vmatpush1.msra.mxu0 0.0
    %301 = vmatprep.subr.mxu0 0.0
    %302 = vmatpush1.msra.mxu0 0.0
    %303 = vmatprep.subr.mxu0 0.0
    %304 = vmatpush1.msra.mxu0 0.0
    %305 = vmatprep.subr.mxu0 0.0
    %306 = vmatpush1.msra.mxu0 0.0
    %307 = vmatprep.subr.mxu0 0.0
    %308 = vmatpush1.msra.mxu0 0.0
    %309 = vmatprep.subr.mxu0 0.0
    %310 = vmatpush1.msra.mxu0 0.0
    %311 = vmatprep.subr.mxu0 0.0
    %312 = vmatpush1.msra.mxu0 0.0
    %313 = vmatprep.subr.mxu0 0.0
    %314 = vmatpush1.msra.mxu0 0.0
    %315 = vmatprep.subr.mxu0 0.0
    %316 = vmatpush1.msra.mxu0 0.0
    %317 = vmatprep.subr.mxu0 0.0
    %318 = vmatpush1.msra.mxu0 0.0
    %319 = vmatprep.subr.mxu0 0.0
    %320 = vmatpush1.msra.mxu0 0.0
    %321 = vmatprep.subr.mxu0 0.0
    %322 = vmatpush1.msra.mxu0 0.0
    %323 = vmatprep.subr.mxu0 0.0
    %324 = vmatpush1.msra.mxu0 0.0
    %325 = vmatprep.subr.mxu0 0.0
    %326 = vmatpush1.msra.mxu0 0.0
    %327 = vmatprep.subr.mxu0 0.0
    %328 = vmatpush1.msra.mxu0 0.0
    %329 = vmatprep.subr.mxu0 0.0
    %330 = vmatpush1.msra.mxu0 0.0
    %331 = vmatprep.subr.mxu0 0.0
    %332 = vmatpush1.msra.mxu0 0.0
    %333 = vmatprep.subr.mxu0 0.0
    %334 = vmatpush1.msra.mxu0 0.0
    %335 = vmatprep.subr.mxu0 0.0
    %336 = vmatpush1.msra.mxu0 0.0
    %337 = vmatprep.subr.mxu0 0.0
    %338 = vmatpush1.msra.mxu0 0.0
    %339 = vmatprep.subr.mxu0 0.0
    %340 = vmatpush1.msra.mxu0 0.0
    %341 = vmatprep.subr.mxu0 0.0
    %342 = vmatpush1.msra.mxu0 0.0
    %343 = vmatprep.mubr.f32.mxu0 0.0
    %344 = vmatmul.mubr.f32.gmra.mrb[0].mxu0 %v136
    %v345 = vpop.f32.mrb[0].mxu0
    %v346 = vadd.f32 %v132, %v345
    %v347 = vpop.f32.mrb[0].mxu0
    %348 = vmatprep.mubr.f32.mxu0 0.0
    %349 = vmatmul.mubr.f32.gmra.mrb[0].mxu0 %v139
    %v350 = vpop.f32.mrb[0].mxu0
    %v351 = vadd.f32 %v132, %v350
    %v352 = vpop.f32.mrb[0].mxu0
    %353 = vmatprep.mubr.f32.mxu0 0.0
    %354 = vmatmul.mubr.f32.gmra.mrb[0].mxu0 %v142
    %v355 = vpop.f32.mrb[0].mxu0
    %v356 = vadd.f32 %v132, %v355
    %v357 = vpop.f32.mrb[0].mxu0
    %358 = vmatprep.mubr.f32.mxu0 0.0
    %359 = vmatmul.mubr.f32.gmra.mrb[0].mxu0 %v145
    %v360 = vpop.f32.mrb[0].mxu0
    %v361 = vadd.f32 %v132, %v360
    %v362 = vpop.f32.mrb[0].mxu0
    %363 = vmatprep.mubr.f32.mxu0 0.0
    %364 = vmatmul.mubr.f32.gmra.mrb[0].mxu0 %v148
    %v365 = vpop.f32.mrb[0].mxu0
    %v366 = vadd.f32 %v132, %v365
    %v367 = vpop.f32.mrb[0].mxu0
    %368 = vmatprep.mubr.f32.mxu0 0.0
    %369 = vmatmul.mubr.f32.gmra.mrb[0].mxu0 %v151
    %v370 = vpop.f32.mrb[0].mxu0
    %v371 = vadd.f32 %v132, %v370
    %v372 = vpop.f32.mrb[0].mxu0
    %373 = vmatprep.mubr.f32.mxu0 0.0
    %374 = vmatmul.mubr.f32.gmra.mrb[0].mxu0 %v154
    %v375 = vpop.f32.mrb[0].mxu0
    %v376 = vadd.f32 %v132, %v375
    %v377 = vpop.f32.mrb[0].mxu0
    %378 = vmatprep.mubr.f32.mxu0 0.0
    %379 = vmatmul.mubr.f32.gmra.mrb[0].mxu0 %v157
    %v380 = vpop.f32.mrb[0].mxu0
    %v381 = vadd.f32 %v132, %v380
    %v382 = vpop.f32.mrb[0].mxu0
    %383 = vmatprep.mubr.f32.mxu0 0.0
    %384 = vmatmul.mubr.f32.gmra.mrb[0].mxu0 %v160
    %v385 = vpop.f32.mrb[0].mxu0
    %v386 = vadd.f32 %v132, %v385
    %v387 = vpop.f32.mrb[0].mxu0
    %388 = vmatprep.mubr.f32.mxu0 0.0
    %389 = vmatmul.mubr.f32.gmra.mrb[0].mxu0 %v163
    %v390 = vpop.f32.mrb[0].mxu0
    %v391 = vadd.f32 %v132, %v390
    %v392 = vpop.f32.mrb[0].mxu0
    %393 = vmatprep.mubr.f32.mxu0 0.0
    %394 = vmatmul.mubr.f32.gmra.mrb[0].mxu0 %v166
    %v395 = vpop.f32.mrb[0].mxu0
    %v396 = vadd.f32 %v132, %v395
    %v397 = vpop.f32.mrb[0].mxu0
    %398 = vmatprep.mubr.f32.mxu0 0.0
    %399 = vmatmul.mubr.f32.gmra.mrb[0].mxu0 %v169
    %v400 = vpop.f32.mrb[0].mxu0
    %v401 = vadd.f32 %v132, %v400
    %v402 = vpop.f32.mrb[0].mxu0
    %403 = vmatprep.mubr.f32.mxu0 0.0
    %404 = vmatmul.mubr.f32.gmra.mrb[0].mxu0 %v172
    %v405 = vpop.f32.mrb[0].mxu0
    %v406 = vadd.f32 %v132, %v405
    %v407 = vpop.f32.mrb[0].mxu0
    %408 = vmatprep.mubr.f32.mxu0 0.0
    %409 = vmatmul.mubr.f32.gmra.mrb[0].mxu0 %v175
    %v410 = vpop.f32.mrb[0].mxu0
    %v411 = vadd.f32 %v132, %v410
    %v412 = vpop.f32.mrb[0].mxu0
    %413 = vmatprep.mubr.f32.mxu0 0.0
    %414 = vmatmul.mubr.f32.gmra.mrb[0].mxu0 %v178
    %v415 = vpop.f32.mrb[0].mxu0
    %v416 = vadd.f32 %v132, %v415
    %v417 = vpop.f32.mrb[0].mxu0
    %418 = vmatprep.mubr.f32.mxu0 0.0
    %419 = vmatmul.mubr.f32.gmra.mrb[0].mxu0 %v181
    %v420 = vpop.f32.mrb[0].mxu0
    %v421 = vadd.f32 %v132, %v420
    %v422 = vpop.f32.mrb[0].mxu0
    %423 = vmatprep.mubr.f32.mxu0 0.0
    %424 = vmatmul.mubr.f32.gmra.mrb[0].mxu0 %v184
    %v425 = vpop.f32.mrb[0].mxu0
    %v426 = vadd.f32 %v132, %v425
    %v427 = vpop.f32.mrb[0].mxu0
    %428 = vmatprep.mubr.f32.mxu0 0.0
    %429 = vmatmul.mubr.f32.gmra.mrb[0].mxu0 %v187
    %v430 = vpop.f32.mrb[0].mxu0
    %v431 = vadd.f32 %v132, %v430
    %v432 = vpop.f32.mrb[0].mxu0
    %433 = vmatprep.mubr.f32.mxu0 0.0
    %434 = vmatmul.mubr.f32.gmra.mrb[0].mxu0 %v190
    %v435 = vpop.f32.mrb[0].mxu0
    %v436 = vadd.f32 %v132, %v435
    %v437 = vpop.f32.mrb[0].mxu0
    %438 = vmatprep.mubr.f32.mxu0 0.0
    %439 = vmatmul.mubr.f32.gmra.mrb[0].mxu0 %v193
    %v440 = vpop.f32.mrb[0].mxu0
    %v441 = vadd.f32 %v132, %v440
    %v442 = vpop.f32.mrb[0].mxu0
    %443 = vmatprep.mubr.f32.mxu0 0.0
    %444 = vmatmul.mubr.f32.gmra.mrb[0].mxu0 %v196
    %v445 = vpop.f32.mrb[0].mxu0
    %v446 = vadd.f32 %v132, %v445
    %v447 = vpop.f32.mrb[0].mxu0
    %448 = vmatprep.mubr.f32.mxu0 0.0
    %449 = vmatmul.mubr.f32.gmra.mrb[0].mxu0 %v199
    %v450 = vpop.f32.mrb[0].mxu0
    %v451 = vadd.f32 %v132, %v450
    %v452 = vpop.f32.mrb[0].mxu0
    %453 = vmatprep.mubr.f32.mxu0 0.0
    %454 = vmatmul.mubr.f32.gmra.mrb[0].mxu0 %v202
    %v455 = vpop.f32.mrb[0].mxu0
    %v456 = vadd.f32 %v132, %v455
    %v457 = vpop.f32.mrb[0].mxu0
    %458 = vmatprep.mubr.f32.mxu0 0.0
    %459 = vmatmul.mubr.f32.gmra.mrb[0].mxu0 %v205
    %v460 = vpop.f32.mrb[0].mxu0
    %v461 = vadd.f32 %v132, %v460
    %v462 = vpop.f32.mrb[0].mxu0
    %463 = vmatprep.mubr.f32.mxu0 0.0
    %464 = vmatmul.mubr.f32.gmra.mrb[0].mxu0 %v208
    %v465 = vpop.f32.mrb[0].mxu0
    %v466 = vadd.f32 %v132, %v465
    %v467 = vpop.f32.mrb[0].mxu0
    %468 = vmatprep.mubr.f32.mxu0 0.0
    %469 = vmatmul.mubr.f32.gmra.mrb[0].mxu0 %v211
    %v470 = vpop.f32.mrb[0].mxu0
    %v471 = vadd.f32 %v132, %v470
    %v472 = vpop.f32.mrb[0].mxu0
    %473 = vmatprep.mubr.f32.mxu0 0.0
    %474 = vmatmul.mubr.f32.gmra.mrb[0].mxu0 %v214
    %v475 = vpop.f32.mrb[0].mxu0
    %v476 = vadd.f32 %v132, %v475
    %v477 = vpop.f32.mrb[0].mxu0
    %478 = vmatprep.mubr.f32.mxu0 0.0
    %479 = vmatmul.mubr.f32.gmra.mrb[0].mxu0 %v217
    %v480 = vpop.f32.mrb[0].mxu0
    %v481 = vadd.f32 %v132, %v480
    %v482 = vpop.f32.mrb[0].mxu0
    %483 = vmatprep.mubr.f32.mxu0 0.0
    %484 = vmatmul.mubr.f32.gmra.mrb[0].mxu0 %v220
    %v485 = vpop.f32.mrb[0].mxu0
    %v486 = vadd.f32 %v132, %v485
    %v487 = vpop.f32.mrb[0].mxu0
    %488 = vmatprep.mubr.f32.mxu0 0.0
    %489 = vmatmul.mubr.f32.gmra.mrb[0].mxu0 %v223
    %v490 = vpop.f32.mrb[0].mxu0
    %v491 = vadd.f32 %v132, %v490
    %v492 = vpop.f32.mrb[0].mxu0
    %493 = vmatprep.mubr.f32.mxu0 0.0
    %494 = vmatmul.mubr.f32.gmra.mrb[0].mxu0 %v226
    %v495 = vpop.f32.mrb[0].mxu0
    %v496 = vadd.f32 %v132, %v495
    %v497 = vpop.f32.mrb[0].mxu0
    %498 = vmatprep.mubr.f32.mxu0 0.0
    %499 = vmatmul.mubr.f32.gmra.mrb[0].mxu0 %v229
    %v500 = vpop.f32.mrb[0].mxu0
    %v501 = vadd.f32 %v132, %v500
    %v502 = vpop.f32.mrb[0].mxu0
    %503 = vmatprep.mubr.f32.mxu0 0.0
    %504 = vmatmul.mubr.f32.gmra.mrb[0].mxu0 %v232
    %v505 = vpop.f32.mrb[0].mxu0
    %v506 = vadd.f32 %v132, %v505
    %v507 = vpop.f32.mrb[0].mxu0
    %508 = vmatprep.mubr.f32.mxu0 0.0
    %509 = vmatmul.mubr.f32.gmra.mrb[0].mxu0 %v235
    %v510 = vpop.f32.mrb[0].mxu0
    %v511 = vadd.f32 %v132, %v510
    %v512 = vpop.f32.mrb[0].mxu0
    %513 = vmatprep.mubr.f32.mxu0 0.0
    %514 = vmatmul.mubr.f32.gmra.mrb[0].mxu0 %v238
    %v515 = vpop.f32.mrb[0].mxu0
    %v516 = vadd.f32 %v132, %v515
    %v517 = vpop.f32.mrb[0].mxu0
    %518 = vmatprep.mubr.f32.mxu0 0.0
    %519 = vmatmul.mubr.f32.gmra.mrb[0].mxu0 %v241
    %v520 = vpop.f32.mrb[0].mxu0
    %v521 = vadd.f32 %v132, %v520
    %v522 = vpop.f32.mrb[0].mxu0
    %523 = vmatprep.mubr.f32.mxu0 0.0
    %524 = vmatmul.mubr.f32.gmra.mrb[0].mxu0 %v244
    %v525 = vpop.f32.mrb[0].mxu0
    %v526 = vadd.f32 %v132, %v525
    %v527 = vpop.f32.mrb[0].mxu0
    %528 = vmatprep.mubr.f32.mxu0 0.0
    %529 = vmatmul.mubr.f32.gmra.mrb[0].mxu0 %v247
    %v530 = vpop.f32.mrb[0].mxu0
    %v531 = vadd.f32 %v132, %v530
    %v532 = vpop.f32.mrb[0].mxu0
    %533 = vmatprep.mubr.f32.mxu0 0.0
    %534 = vmatmul.mubr.f32.gmra.mrb[0].mxu0 %v250
    %v535 = vpop.f32.mrb[0].mxu0
    %v536 = vadd.f32 %v132, %v535
    %v537 = vpop.f32.mrb[0].mxu0
    %538 = vmatprep.mubr.f32.mxu0 0.0
    %539 = vmatmul.mubr.f32.gmra.mrb[0].mxu0 %v253
    %v540 = vpop.f32.mrb[0].mxu0
    %v541 = vadd.f32 %v132, %v540
    %v542 = vpop.f32.mrb[0].mxu0
    %543 = vmatprep.mubr.f32.mxu0 0.0
    %544 = vmatmul.mubr.f32.gmra.mrb[0].mxu0 %v256
    %v545 = vpop.f32.mrb[0].mxu0
    %v546 = vadd.f32 %v132, %v545
    %v547 = vpop.f32.mrb[0].mxu0
    %548 = vmatprep.mubr.f32.mxu0 0.0
    %549 = vmatmul.mubr.f32.gmra.mrb[0].mxu0 %v259
    %v550 = vpop.f32.mrb[0].mxu0
    %v551 = vadd.f32 %v132, %v550
    %v552 = vpop.f32.mrb[0].mxu0
    %553 = vmatprep.mubr.f32.mxu0 0.0
    %554 = vmatmul.mubr.f32.gmra.mrb[0].mxu0 %v262
    %v555 = vpop.f32.mrb[0].mxu0
    %v556 = vadd.f32 %v132, %v555
    %v557 = vpop.f32.mrb[0].mxu0
    %558 = vmatprep.mubr.f32.mxu0 0.0
    %559 = vmatmul.mubr.f32.gmra.mrb[0].mxu0 %v265
    %v560 = vpop.f32.mrb[0].mxu0
    %v561 = vadd.f32 %v132, %v560
    %v562 = vpop.f32.mrb[0].mxu0
    %563 = vmatprep.mubr.f32.mxu0 0.0
    %564 = vmatmul.mubr.f32.gmra.mrb[0].mxu0 %v268
    %v565 = vpop.f32.mrb[0].mxu0
    %v566 = vadd.f32 %v132, %v565
    %v567 = vpop.f32.mrb[0].mxu0
    %568 = vmatprep.mubr.f32.mxu0 0.0
    %569 = vmatmul.mubr.f32.gmra.mrb[0].mxu0 %v271
    %v570 = vpop.f32.mrb[0].mxu0
    %v571 = vadd.f32 %v132, %v570
    %v572 = vpop.f32.mrb[0].mxu0
    %573 = vmatprep.mubr.f32.mxu0 0.0
    %574 = vmatmul.mubr.f32.gmra.mrb[0].mxu0 %v274
    %v575 = vpop.f32.mrb[0].mxu0
    %v576 = vadd.f32 %v132, %v575
    %v577 = vpop.f32.mrb[0].mxu0
    %578 = vmatprep.mubr.f32.mxu0 0.0
    %579 = vmatmul.mubr.f32.gmra.mrb[0].mxu0 %v277
    %v580 = vpop.f32.mrb[0].mxu0
    %v581 = vadd.f32 %v132, %v580
    %v582 = vpop.f32.mrb[0].mxu0
    %583 = vdwg.mxu0
    %v584 = vld [vmem:[#allocation3] sm:$0x7]
    %v585 = vlaneseq
    %v586 = vshrl.u32 %v585, 7
    %v587 = vlaneseq
    %v588 = vshrl.u32 %v587, 7
    %v589 = vsub.s32 0, %v588
    %v590 = vrot.slane %v584, %v589
    %v591 = vlaneseq
    %v592 = vshrl.u32 %v591, 7
    %v593 = vsub.s32 1, %v592
    %v594 = vrot.slane %v584, %v593
    %v595 = vlaneseq
    %v596 = vshrl.u32 %v595, 7
    %v597 = vsub.s32 2, %v596
    %v598 = vrot.slane %v584, %v597
    %vm599 = vcmp.eq.s32.totalorder %v590, %v586
    %vm600 = vcmp.eq.s32.totalorder %v594, %v586
    %vm601 = vcmp.eq.s32.totalorder %v598, %v586
    %v602 = vsel %vm599, 1, 0
    %v603 = vsel %vm600, 1, 0
    %v604 = vsel %vm601, 1, 0
    %v605 = vcvt.s32.f32 %v602
    %v606 = vcvt.s32.f32 %v603
    %v607 = vcvt.s32.f32 %v604
    %v608 = vmul.f32 %v346, %v346
    %v609 = vmul.f32 %v351, %v351
    %v610 = vmul.f32 %v356, %v356
    %v611 = vmul.f32 %v361, %v361
    %v612 = vmul.f32 %v366, %v366
    %v613 = vmul.f32 %v371, %v371
    %v614 = vmul.f32 %v376, %v376
    %v615 = vmul.f32 %v381, %v381
    %v616 = vmul.f32 %v386, %v386
    %v617 = vmul.f32 %v391, %v391
    %v618 = vmul.f32 %v396, %v396
    %v619 = vmul.f32 %v401, %v401
    %v620 = vmul.f32 %v406, %v406
    %v621 = vmul.f32 %v411, %v411
    %v622 = vmul.f32 %v416, %v416
    %v623 = vmul.f32 %v421, %v421
    %v624 = vmul.f32 %v426, %v426
    %v625 = vmul.f32 %v431, %v431
    %v626 = vmul.f32 %v436, %v436
    %v627 = vmul.f32 %v441, %v441
    %v628 = vmul.f32 %v446, %v446
    %v629 = vmul.f32 %v451, %v451
    %v630 = vmul.f32 %v456, %v456
    %v631 = vmul.f32 %v461, %v461
    %v632 = vmul.f32 %v466, %v466
    %v633 = vmul.f32 %v471, %v471
    %v634 = vmul.f32 %v476, %v476
    %v635 = vmul.f32 %v481, %v481
    %v636 = vmul.f32 %v486, %v486
    %v637 = vmul.f32 %v491, %v491
    %v638 = vmul.f32 %v496, %v496
    %v639 = vmul.f32 %v501, %v501
    %v640 = vmul.f32 %v506, %v506
    %v641 = vmul.f32 %v511, %v511
    %v642 = vmul.f32 %v516, %v516
    %v643 = vmul.f32 %v521, %v521
    %v644 = vmul.f32 %v526, %v526
    %v645 = vmul.f32 %v531, %v531
    %v646 = vmul.f32 %v536, %v536
    %v647 = vmul.f32 %v541, %v541
    %v648 = vmul.f32 %v546, %v546
    %v649 = vmul.f32 %v551, %v551
    %v650 = vmul.f32 %v556, %v556
    %v651 = vmul.f32 %v561, %v561
    %v652 = vmul.f32 %v566, %v566
    %v653 = vmul.f32 %v571, %v571
    %v654 = vmul.f32 %v576, %v576
    %v655 = vmul.f32 %v581, %v581
    %704 = vrot.lane.b32.xlu0 %v608, 8
    %v705 = vpop.permute.xlu0 %704
    %706 = vrot.lane.b32.xlu0 %v609, 8
    %v707 = vpop.permute.xlu0 %706
    %708 = vrot.lane.b32.xlu0 %v610, 8
    %v709 = vpop.permute.xlu0 %708
    %710 = vrot.lane.b32.xlu0 %v611, 8
    %v711 = vpop.permute.xlu0 %710
    %712 = vrot.lane.b32.xlu0 %v612, 8
    %v713 = vpop.permute.xlu0 %712
    %714 = vrot.lane.b32.xlu0 %v613, 8
    %v715 = vpop.permute.xlu0 %714
    %716 = vrot.lane.b32.xlu0 %v614, 8
    %v717 = vpop.permute.xlu0 %716
    %718 = vrot.lane.b32.xlu0 %v615, 8
    %v719 = vpop.permute.xlu0 %718
    %720 = vrot.lane.b32.xlu0 %v616, 8
    %v721 = vpop.permute.xlu0 %720
    %722 = vrot.lane.b32.xlu0 %v617, 8
    %v723 = vpop.permute.xlu0 %722
    %724 = vrot.lane.b32.xlu0 %v618, 8
    %v725 = vpop.permute.xlu0 %724
    %726 = vrot.lane.b32.xlu0 %v619, 8
    %v727 = vpop.permute.xlu0 %726
    %728 = vrot.lane.b32.xlu0 %v620, 8
    %v729 = vpop.permute.xlu0 %728
    %730 = vrot.lane.b32.xlu0 %v621, 8
    %v731 = vpop.permute.xlu0 %730
    %732 = vrot.lane.b32.xlu0 %v622, 8
    %v733 = vpop.permute.xlu0 %732
    %734 = vrot.lane.b32.xlu0 %v623, 8
    %v735 = vpop.permute.xlu0 %734
    %736 = vrot.lane.b32.xlu0 %v624, 8
    %v737 = vpop.permute.xlu0 %736
    %738 = vrot.lane.b32.xlu0 %v625, 8
    %v739 = vpop.permute.xlu0 %738
    %740 = vrot.lane.b32.xlu0 %v626, 8
    %v741 = vpop.permute.xlu0 %740
    %742 = vrot.lane.b32.xlu0 %v627, 8
    %v743 = vpop.permute.xlu0 %742
    %744 = vrot.lane.b32.xlu0 %v628, 8
    %v745 = vpop.permute.xlu0 %744
    %746 = vrot.lane.b32.xlu0 %v629, 8
    %v747 = vpop.permute.xlu0 %746
    %748 = vrot.lane.b32.xlu0 %v630, 8
    %v749 = vpop.permute.xlu0 %748
    %750 = vrot.lane.b32.xlu0 %v631, 8
    %v751 = vpop.permute.xlu0 %750
    %752 = vrot.lane.b32.xlu0 %v632, 8
    %v753 = vpop.permute.xlu0 %752
    %754 = vrot.lane.b32.xlu0 %v633, 8
    %v755 = vpop.permute.xlu0 %754
    %756 = vrot.lane.b32.xlu0 %v634, 8
    %v757 = vpop.permute.xlu0 %756
    %758 = vrot.lane.b32.xlu0 %v635, 8
    %v759 = vpop.permute.xlu0 %758
    %760 = vrot.lane.b32.xlu0 %v636, 8
    %v761 = vpop.permute.xlu0 %760
    %762 = vrot.lane.b32.xlu0 %v637, 8
    %v763 = vpop.permute.xlu0 %762
    %764 = vrot.lane.b32.xlu0 %v638, 8
    %v765 = vpop.permute.xlu0 %764
    %766 = vrot.lane.b32.xlu0 %v639, 8
    %v767 = vpop.permute.xlu0 %766
    %768 = vrot.lane.b32.xlu0 %v640, 8
    %v769 = vpop.permute.xlu0 %768
    %770 = vrot.lane.b32.xlu0 %v641, 8
    %v771 = vpop.permute.xlu0 %770
    %772 = vrot.lane.b32.xlu0 %v642, 8
    %v773 = vpop.permute.xlu0 %772
    %774 = vrot.lane.b32.xlu0 %v643, 8
    %v775 = vpop.permute.xlu0 %774
    %776 = vrot.lane.b32.xlu0 %v644, 8
    %v777 = vpop.permute.xlu0 %776
    %778 = vrot.lane.b32.xlu0 %v645, 8
    %v779 = vpop.permute.xlu0 %778
    %780 = vrot.lane.b32.xlu0 %v646, 8
    %v781 = vpop.permute.xlu0 %780
    %782 = vrot.lane.b32.xlu0 %v647, 8
    %v783 = vpop.permute.xlu0 %782
    %784 = vrot.lane.b32.xlu0 %v648, 8
    %v785 = vpop.permute.xlu0 %784
    %786 = vrot.lane.b32.xlu0 %v649, 8
    %v787 = vpop.permute.xlu0 %786
    %788 = vrot.lane.b32.xlu0 %v650, 8
    %v789 = vpop.permute.xlu0 %788
    %790 = vrot.lane.b32.xlu0 %v651, 8
    %v791 = vpop.permute.xlu0 %790
    %792 = vrot.lane.b32.xlu0 %v652, 8
    %v793 = vpop.permute.xlu0 %792
    %794 = vrot.lane.b32.xlu0 %v653, 8
    %v795 = vpop.permute.xlu0 %794
    %796 = vrot.lane.b32.xlu0 %v654, 8
    %v797 = vpop.permute.xlu0 %796
    %798 = vrot.lane.b32.xlu0 %v655, 8
    %v799 = vpop.permute.xlu0 %798
    %vm848 = vcmask 64512
    %v849 = vsel %vm848, %v346, %v705
    %v850 = vsel %vm848, %v351, %v707
    %v851 = vsel %vm848, %v356, %v709
    %v852 = vsel %vm848, %v361, %v711
    %v853 = vsel %vm848, %v366, %v713
    %v854 = vsel %vm848, %v371, %v715
    %v855 = vsel %vm848, %v376, %v717
    %v856 = vsel %vm848, %v381, %v719
    %v857 = vsel %vm848, %v386, %v721
    %v858 = vsel %vm848, %v391, %v723
    %v859 = vsel %vm848, %v396, %v725
    %v860 = vsel %vm848, %v401, %v727
    %v861 = vsel %vm848, %v406, %v729
    %v862 = vsel %vm848, %v411, %v731
    %v863 = vsel %vm848, %v416, %v733
    %v864 = vsel %vm848, %v421, %v735
    %v865 = vsel %vm848, %v426, %v737
    %v866 = vsel %vm848, %v431, %v739
    %v867 = vsel %vm848, %v436, %v741
    %v868 = vsel %vm848, %v441, %v743
    %v869 = vsel %vm848, %v446, %v745
    %v870 = vsel %vm848, %v451, %v747
    %v871 = vsel %vm848, %v456, %v749
    %v872 = vsel %vm848, %v461, %v751
    %v873 = vsel %vm848, %v466, %v753
    %v874 = vsel %vm848, %v471, %v755
    %v875 = vsel %vm848, %v476, %v757
    %v876 = vsel %vm848, %v481, %v759
    %v877 = vsel %vm848, %v486, %v761
    %v878 = vsel %vm848, %v491, %v763
    %v879 = vsel %vm848, %v496, %v765
    %v880 = vsel %vm848, %v501, %v767
    %v881 = vsel %vm848, %v506, %v769
    %v882 = vsel %vm848, %v511, %v771
    %v883 = vsel %vm848, %v516, %v773
    %v884 = vsel %vm848, %v521, %v775
    %v885 = vsel %vm848, %v526, %v777
    %v886 = vsel %vm848, %v531, %v779
    %v887 = vsel %vm848, %v536, %v781
    %v888 = vsel %vm848, %v541, %v783
    %v889 = vsel %vm848, %v546, %v785
    %v890 = vsel %vm848, %v551, %v787
    %v891 = vsel %vm848, %v556, %v789
    %v892 = vsel %vm848, %v561, %v791
    %v893 = vsel %vm848, %v566, %v793
    %v894 = vsel %vm848, %v571, %v795
    %v895 = vsel %vm848, %v576, %v797
    %v896 = vsel %vm848, %v581, %v799
    %vm897 = vcmask 130048
    %v898 = vsel %vm897, %v849, 1.0
    %v899 = vsel %vm897, %v850, 1.0
    %v900 = vsel %vm897, %v851, 1.0
    %v901 = vsel %vm897, %v852, 1.0
    %v902 = vsel %vm897, %v853, 1.0
    %v903 = vsel %vm897, %v854, 1.0
    %v904 = vsel %vm897, %v855, 1.0
    %v905 = vsel %vm897, %v856, 1.0
    %v906 = vsel %vm897, %v857, 1.0
    %v907 = vsel %vm897, %v858, 1.0
    %v908 = vsel %vm897, %v859, 1.0
    %v909 = vsel %vm897, %v860, 1.0
    %v910 = vsel %vm897, %v861, 1.0
    %v911 = vsel %vm897, %v862, 1.0
    %v912 = vsel %vm897, %v863, 1.0
    %v913 = vsel %vm897, %v864, 1.0
    %v914 = vsel %vm897, %v865, 1.0
    %v915 = vsel %vm897, %v866, 1.0
    %v916 = vsel %vm897, %v867, 1.0
    %v917 = vsel %vm897, %v868, 1.0
    %v918 = vsel %vm897, %v869, 1.0
    %v919 = vsel %vm897, %v870, 1.0
    %v920 = vsel %vm897, %v871, 1.0
    %v921 = vsel %vm897, %v872, 1.0
    %v922 = vsel %vm897, %v873, 1.0
    %v923 = vsel %vm897, %v874, 1.0
    %v924 = vsel %vm897, %v875, 1.0
    %v925 = vsel %vm897, %v876, 1.0
    %v926 = vsel %vm897, %v877, 1.0
    %v927 = vsel %vm897, %v878, 1.0
    %v928 = vsel %vm897, %v879, 1.0
    %v929 = vsel %vm897, %v880, 1.0
    %v930 = vsel %vm897, %v881, 1.0
    %v931 = vsel %vm897, %v882, 1.0
    %v932 = vsel %vm897, %v883, 1.0
    %v933 = vsel %vm897, %v884, 1.0
    %v934 = vsel %vm897, %v885, 1.0
    %v935 = vsel %vm897, %v886, 1.0
    %v936 = vsel %vm897, %v887, 1.0
    %v937 = vsel %vm897, %v888, 1.0
    %v938 = vsel %vm897, %v889, 1.0
    %v939 = vsel %vm897, %v890, 1.0
    %v940 = vsel %vm897, %v891, 1.0
    %v941 = vsel %vm897, %v892, 1.0
    %v942 = vsel %vm897, %v893, 1.0
    %v943 = vsel %vm897, %v894, 1.0
    %v944 = vsel %vm897, %v895, 1.0
    %v945 = vsel %vm897, %v896, 1.0
    %v946 = vld [vmem:[#allocation2] sm:$0x1f]
    %947 = vmatprep.subr.mxu0 0.0
    %948 = vmatpush1.msra.mxu0 %v898
    %949 = vmatprep.subr.mxu0 0.0
    %950 = vmatpush1.msra.mxu0 %v899
    %951 = vmatprep.subr.mxu0 0.0
    %952 = vmatpush1.msra.mxu0 %v900
    %953 = vmatprep.subr.mxu0 0.0
    %954 = vmatpush1.msra.mxu0 %v901
    %955 = vmatprep.subr.mxu0 0.0
    %956 = vmatpush1.msra.mxu0 %v902
    %957 = vmatprep.subr.mxu0 0.0
    %958 = vmatpush1.msra.mxu0 %v903
    %959 = vmatprep.subr.mxu0 0.0
    %960 = vmatpush1.msra.mxu0 %v904
    %961 = vmatprep.subr.mxu0 0.0
    %962 = vmatpush1.msra.mxu0 %v905
    %963 = vmatprep.subr.mxu0 0.0
    %964 = vmatpush1.msra.mxu0 %v906
    %965 = vmatprep.subr.mxu0 0.0
    %966 = vmatpush1.msra.mxu0 %v907
    %967 = vmatprep.subr.mxu0 0.0
    %968 = vmatpush1.msra.mxu0 %v908
    %969 = vmatprep.subr.mxu0 0.0
    %970 = vmatpush1.msra.mxu0 %v909
    %971 = vmatprep.subr.mxu0 0.0
    %972 = vmatpush1.msra.mxu0 %v910
    %973 = vmatprep.subr.mxu0 0.0
    %974 = vmatpush1.msra.mxu0 %v911
    %975 = vmatprep.subr.mxu0 0.0
    %976 = vmatpush1.msra.mxu0 %v912
    %977 = vmatprep.subr.mxu0 0.0
    %978 = vmatpush1.msra.mxu0 %v913
    %979 = vmatprep.subr.mxu0 0.0
    %980 = vmatpush1.msra.mxu0 %v914
    %981 = vmatprep.subr.mxu0 0.0
    %982 = vmatpush1.msra.mxu0 %v915
    %983 = vmatprep.subr.mxu0 0.0
    %984 = vmatpush1.msra.mxu0 %v916
    %985 = vmatprep.subr.mxu0 0.0
    %986 = vmatpush1.msra.mxu0 %v917
    %987 = vmatprep.subr.mxu0 0.0
    %988 = vmatpush1.msra.mxu0 %v918
    %989 = vmatprep.subr.mxu0 0.0
    %990 = vmatpush1.msra.mxu0 %v919
    %991 = vmatprep.subr.mxu0 0.0
    %992 = vmatpush1.msra.mxu0 %v920
    %993 = vmatprep.subr.mxu0 0.0
    %994 = vmatpush1.msra.mxu0 %v921
    %995 = vmatprep.subr.mxu0 0.0
    %996 = vmatpush1.msra.mxu0 %v922
    %997 = vmatprep.subr.mxu0 0.0
    %998 = vmatpush1.msra.mxu0 %v923
    %999 = vmatprep.subr.mxu0 0.0
    %1000 = vmatpush1.msra.mxu0 %v924
    %1001 = vmatprep.subr.mxu0 0.0
    %1002 = vmatpush1.msra.mxu0 %v925
    %1003 = vmatprep.subr.mxu0 0.0
    %1004 = vmatpush1.msra.mxu0 %v926
    %1005 = vmatprep.subr.mxu0 0.0
    %1006 = vmatpush1.msra.mxu0 %v927
    %1007 = vmatprep.subr.mxu0 0.0
    %1008 = vmatpush1.msra.mxu0 %v928
    %1009 = vmatprep.subr.mxu0 0.0
    %1010 = vmatpush1.msra.mxu0 %v929
    %1011 = vmatprep.mubr.f32.mxu0 %v606
    %1012 = vmatmul.mubr.f32.gmra.mrb[0].mxu0 %v605
    %v1013 = vpop.f32.mrb[0].mxu0
    %v1014 = vadd.f32 0.0, %v1013
    %v1015 = vpop.f32.mrb[0].mxu0
    %1016 = vdwg.mxu0
    %1017 = vmatprep.subr.mxu0 0.0
    %1018 = vmatpush1.msra.mxu0 %v930
    %1019 = vmatprep.subr.mxu0 0.0
    %1020 = vmatpush1.msra.mxu0 %v931
    %1021 = vmatprep.subr.mxu0 0.0
    %1022 = vmatpush1.msra.mxu0 %v932
    %1023 = vmatprep.subr.mxu0 0.0
    %1024 = vmatpush1.msra.mxu0 %v933
    %1025 = vmatprep.subr.mxu0 0.0
    %1026 = vmatpush1.msra.mxu0 %v934
    %1027 = vmatprep.subr.mxu0 0.0
    %1028 = vmatpush1.msra.mxu0 %v935
    %1029 = vmatprep.subr.mxu0 0.0
    %1030 = vmatpush1.msra.mxu0 %v936
    %1031 = vmatprep.subr.mxu0 0.0
    %1032 = vmatpush1.msra.mxu0 %v937
    %1033 = vmatprep.subr.mxu0 0.0
    %1034 = vmatpush1.msra.mxu0 %v938
    %1035 = vmatprep.subr.mxu0 0.0
    %1036 = vmatpush1.msra.mxu0 %v939
    %1037 = vmatprep.subr.mxu0 0.0
    %1038 = vmatpush1.msra.mxu0 %v940
    %1039 = vmatprep.subr.mxu0 0.0
    %1040 = vmatpush1.msra.mxu0 %v941
    %1041 = vmatprep.subr.mxu0 0.0
    %1042 = vmatpush1.msra.mxu0 %v942
    %1043 = vmatprep.subr.mxu0 0.0
    %1044 = vmatpush1.msra.mxu0 %v943
    %1045 = vmatprep.subr.mxu0 0.0
    %1046 = vmatpush1.msra.mxu0 %v944
    %1047 = vmatprep.subr.mxu0 0.0
    %1048 = vmatpush1.msra.mxu0 %v945
    %1049 = vmatprep.subr.mxu0 0.0
    %1050 = vmatpush1.msra.mxu0 0.0
    %1051 = vmatprep.subr.mxu0 0.0
    %1052 = vmatpush1.msra.mxu0 0.0
    %1053 = vmatprep.subr.mxu0 0.0
    %1054 = vmatpush1.msra.mxu0 0.0
    %1055 = vmatprep.subr.mxu0 0.0
    %1056 = vmatpush1.msra.mxu0 0.0
    %1057 = vmatprep.subr.mxu0 0.0
    %1058 = vmatpush1.msra.mxu0 0.0
    %1059 = vmatprep.subr.mxu0 0.0
    %1060 = vmatpush1.msra.mxu0 0.0
    %1061 = vmatprep.subr.mxu0 0.0
    %1062 = vmatpush1.msra.mxu0 0.0
    %1063 = vmatprep.subr.mxu0 0.0
    %1064 = vmatpush1.msra.mxu0 0.0
    %1065 = vmatprep.subr.mxu0 0.0
    %1066 = vmatpush1.msra.mxu0 0.0
    %1067 = vmatprep.subr.mxu0 0.0
    %1068 = vmatpush1.msra.mxu0 0.0
    %1069 = vmatprep.subr.mxu0 0.0
    %1070 = vmatpush1.msra.mxu0 0.0
    %1071 = vmatprep.subr.mxu0 0.0
    %1072 = vmatpush1.msra.mxu0 0.0
    %1073 = vmatprep.subr.mxu0 0.0
    %1074 = vmatpush1.msra.mxu0 0.0
    %1075 = vmatprep.subr.mxu0 0.0
    %1076 = vmatpush1.msra.mxu0 0.0
    %1077 = vmatprep.subr.mxu0 0.0
    %1078 = vmatpush1.msra.mxu0 0.0
    %1079 = vmatprep.subr.mxu0 0.0
    %1080 = vmatpush1.msra.mxu0 0.0
    %1081 = vmatprep.mubr.f32.mxu0 0.0
    %1082 = vmatmul.mubr.f32.gmra.mrb[0].mxu0 %v607
    %v1083 = vpop.f32.mrb[0].mxu0
    %v1084 = vadd.f32 %v1014, %v1083
    %v1085 = vpop.f32.mrb[0].mxu0
    %1086 = vdwg.mxu0
    %v1087 = vadd.f32 %v946, %v1084
    %vm1088 = vcmask 135168
    %1089 = vst.msk [vmem:[#allocation2] sm:$0x1f] %vm1088, %v1087
    // Predicated region
    $region38: #{tpu_custom_call.1} parent=1 // pred_check
      %p1090 = pneg %p69
    $region39: #{tpu_custom_call.1} parent=1 // pred_check_branch
      %1092 = sbr.rel (%p1090) target = $region41
    $region40: #{tpu_custom_call.1} parent=1 // pred_region
      %v1093 = vld [vmem:[#allocation2] sm:$0x1f]
      %v1094 = vmax.f32 %v1093, 1.0
      %1096 = vset.pattern.permute.xlu0 16
      %1097 = vperm.xlu0 %1096, %v1094
      %v1098 = vpop.permute.xlu0 %1097
      %v1100 = vrcp.pop %v1098
      %v1101 = vmul.f32 %v1093, %v1100
      %v1102 = vmul.f32 %v1093, %v1101
      %1104 = vrot.lane.b32.xlu0 %v1102, 8
      %v1105 = vpop.permute.xlu0 %1104
      %v1107 = vsub.f32 %v1093, %v1105
      %v1108 = vmax.f32 %v1107, 0.0
      %v1109 = vsub.f32 %v1093, 1.0
      %v1110 = vmax.f32 %v1109, 1.0
      %v1111 = vadd.f32 %v1110, 1e-06
      %1113 = vset.pattern.permute.xlu0 16
      %1114 = vperm.xlu0 %1113, %v1111
      %v1115 = vpop.permute.xlu0 %1114
      %v1117 = vrcp.pop %v1115
      %v1118 = vmul.f32 %v1108, %v1117
      %v1119 = vrsqrt.pop %v1118
      %v1120 = vmul.f32 %v1118, %v1119
      %vm1121 = vcmp.eq.f32.partialorder %v1118, inf
      %v1122 = vsel %vm1121, %v1118, %v1120
      %vm1123 = vcmp.eq.f32.partialorder %v1118, 0.0
      %v1124 = vand.u32 %v1118, 2147483648
      %v1125 = vsel %vm1123, %v1124, %v1122
      %v1126 = vsel %vm848, %v1093, %v1125
      %vm1127 = vcmask 126976
      %1128 = vst.msk [vmem:[#allocation11] sm:$0x1f] %vm1127, %v1126
    $region41: #{tpu_custom_call.1} parent=1 // pred_fallthru
      _
    // Predicated region
    $region42: #{tpu_custom_call.1} parent=1 // pred_check
      _
    $region43: #{tpu_custom_call.1} parent=1 // pred_check_branch
      %1130 = sbr.rel (0) target = $region45
    $region44: #{tpu_custom_call.1} parent=1 // pred_region
      %s1132 = ssub.s32 128, 128
      %1133 = vsyncadd [#allocation5], %s1132
      %s1135 = sshll.u32 [#allocation11], 4
      %s1136 = int_to_ptr.vmem [resolvable:$true] %s1135
      %1138 = dma.vmem_to_hbm [thread:$0]  %s1136, 128, %s4, [#allocation5]
    $region45: #{tpu_custom_call.1} parent=1 // pred_fallthru
      _
    // Predicated region
    $region46: #{tpu_custom_call.1} parent=1 // pred_check
      _
    $region47: #{tpu_custom_call.1} parent=1 // pred_check_branch
      %1140 = sbr.rel (0) target = $region49
    $region48: #{tpu_custom_call.1} parent=1 // pred_region
      %1141 = dma.done [#allocation5], 128
    $region49: #{tpu_custom_call.1} parent=1 // pred_fallthru
      _
    %1142 = vsyncpa [#allocation4], 1
    %1143 = vsyncpa [#allocation7], 1
    %1144 = vsyncpa [#allocation10], 1
    %1145 = vsyncpa [#allocation5], 1

</llo_original>
